<compile_context>
chip_gen: v6e
topology: v6e:2x2x1
jax: 0.10.0
libtpu: 0.0.40
codegen_flags: <defaults>
</compile_context>

<pallas_src>
import functools

import jax
import jax.numpy as jnp
from jax.experimental import pallas as pl
from jax.experimental.pallas import tpu as pltpu


def _affine_kernel(x_ref, scale_ref, bias_ref, o_ref, *, block_rows, block_cols,
                   row_wise, slice_rows, slice_cols):
    # x_ref/o_ref: (R, TC) tile.
    # row_wise:   scale/bias are resident (rows, 1) -> broadcast across lanes.
    # otherwise:  scale/bias are resident (1, cols) -> broadcast across sublanes.
    if row_wise:
        if slice_rows:
            r0 = pl.multiple_of(pl.program_id(0) * block_rows, block_rows)
            s = scale_ref[pl.ds(r0, block_rows), :]
            b = bias_ref[pl.ds(r0, block_rows), :]
        else:
            s = scale_ref[...]
            b = bias_ref[...]
    else:
        if slice_cols:
            c0 = pl.multiple_of(pl.program_id(1) * block_cols, block_cols)
            s = scale_ref[:, pl.ds(c0, block_cols)]
            b = bias_ref[:, pl.ds(c0, block_cols)]
        else:
            s = scale_ref[...]
            b = bias_ref[...]
    x = x_ref[...].astype(jnp.float32)
    o_ref[...] = (x * s + b).astype(o_ref.dtype)


def _divisor_blocks(total, granule):
    """Divisors of `total` that are multiples of `granule`, plus `total` itself."""
    cands = [d for d in range(granule, total + 1, granule) if total % d == 0]
    cands.append(total)
    return sorted(set(cands))


def _choose_tiles(rows, cols, itemsize, sub_granule, target_bytes):
    """Pick (row_block, col_block).

    Preference order:
      1. grids with an even number of steps >= 4 (keeps both v7x TCs pipelined),
         provided the tile is still a reasonable size (>= 256 KiB),
      2. the largest tile that fits `target_bytes`,
      3. wider (lane-dense) column blocks as a tie-break.
    If nothing fits the target, return the smallest possible tile (never blow VMEM).
    """
    row_cands = _divisor_blocks(rows, sub_granule)
    col_cands = _divisor_blocks(cols, 128)

    options = []
    for r in row_cands:
        for tc in col_cands:
            tile_bytes = r * tc * itemsize
            steps = (rows // r) * (cols // tc)
            options.append((r, tc, tile_bytes, steps))

    fitting = [o for o in options if o[2] <= target_bytes]
    if not fitting:
        r, tc, _, _ = min(options, key=lambda o: o[2])
        return r, tc

    def score(o):
        r, tc, tile_bytes, steps = o
        balanced = (steps >= 4) and (steps % 2 == 0) and (tile_bytes >= (256 << 10))
        return (balanced, tile_bytes, tc)

    r, tc, _, _ = max(fitting, key=score)
    return r, tc


def normalize_by_channel_mean_std(x, mean, std, *,
                                  target_block_bytes=8 << 20,
                                  vmem_limit_bytes=48 << 20):
    """x: (N, C, H, W); mean/std: (C,). Returns (x - mean[None,:,None,None]) / std[...]."""
    N, C, H, W = x.shape
    hw = H * W
    itemsize = x.dtype.itemsize
    sub_granule = max(8, 32 // itemsize)   # 8 for f32, 16 for bf16/f16, 32 for int8/fp8

    # Per-channel affine params kept in f32 regardless of x.dtype.
    mean_f = jnp.asarray(mean, jnp.float32)
    std_f = jnp.asarray(std, jnp.float32)
    scale_c = 1.0 / std_f                   # (C,)
    bias_c = -mean_f / std_f                # (C,)

    row_wise = (hw % 128 == 0)
    if row_wise:
        # Lane-dense layout: rows index (n, c); per-row scale/bias broadcast over lanes.
        rows, cols = N * C, hw
        scale = jnp.tile(scale_c, N).reshape(rows, 1)
        bias = jnp.tile(bias_c, N).reshape(rows, 1)
    else:
        # H*W not lane-aligned: use rows=N, cols=C*H*W with a per-lane affine vector
        # (broadcast over sublanes) so lane bandwidth is not wasted on masked ops.
        rows, cols = N, C * hw
        scale = jnp.repeat(scale_c, hw).reshape(1, cols)
        bias = jnp.repeat(bias_c, hw).reshape(1, cols)

    x2 = x.reshape(rows, cols)

    R, TC = _choose_tiles(rows, cols, itemsize, sub_granule, target_block_bytes)
    grid = (rows // R, cols // TC)

    kernel = functools.partial(
        _affine_kernel,
        block_rows=R, block_cols=TC, row_wise=row_wise,
        slice_rows=(rows // R) > 1, slice_cols=(cols // TC) > 1,
    )

    out2 = pl.pallas_call(
        kernel,
        out_shape=jax.ShapeDtypeStruct((rows, cols), x.dtype),
        grid=grid,
        in_specs=[
            pl.BlockSpec((R, TC), lambda i, j: (i, j)),          # x slab (lane-dense)
            pl.BlockSpec(scale.shape, lambda i, j: (0, 0)),      # resident scale (f32)
            pl.BlockSpec(bias.shape, lambda i, j: (0, 0)),       # resident bias  (f32)
        ],
        out_specs=pl.BlockSpec((R, TC), lambda i, j: (i, j)),
        compiler_params=pltpu.CompilerParams(
            dimension_semantics=("parallel", "parallel"),
            vmem_limit_bytes=vmem_limit_bytes,
        ),
        cost_estimate=pl.CostEstimate(
            flops=2 * rows * cols,
            transcendentals=0,
            bytes_accessed=2 * rows * cols * itemsize,
        ),
    )(x2, scale, bias)

    return out2.reshape(N, C, H, W)


if __name__ == "__main__":
    key = jax.random.PRNGKey(0)
    N, C, H, W = 2, 4, 16, 16

    kx, km, ks = jax.random.split(key, 3)
    x = jax.random.normal(kx, (N, C, H, W), dtype=jnp.float32)
    # Deterministic "buffer" parameters (module __init__ takes mean/std of shape (C,)).
    mean = jax.random.uniform(km, (C,), dtype=jnp.float32, minval=-0.5, maxval=0.5)
    std = jax.random.uniform(ks, (C,), dtype=jnp.float32, minval=0.5, maxval=1.5)

    out = normalize_by_channel_mean_std(x, mean, std)
    out = jax.block_until_ready(out)

    # Reference (pure JAX) check of forward semantics.
    ref = (x - mean[None, :, None, None]) / std[None, :, None, None]
    assert out.shape == x.shape and out.dtype == x.dtype
    assert jnp.allclose(out, ref, atol=1e-5, rtol=1e-5)

    print("KERNEL_OK")
</pallas_src>

<mosaic_0001>
module attributes {stable_mosaic.version = 11 : i64} {
  func.func @_affine_kernel(%arg0: i32, %arg1: i32, %arg2: memref<8x256xf32, #tpu.memory_space<vmem>>, %arg3: memref<8x1xf32, #tpu.memory_space<vmem>>, %arg4: memref<8x1xf32, #tpu.memory_space<vmem>>, %arg5: memref<8x256xf32, #tpu.memory_space<vmem>>) attributes {dimension_semantics = [#tpu.dimension_semantics<parallel>, #tpu.dimension_semantics<parallel>], iteration_bounds = array<i64: 1, 1>, scalar_prefetch = 0 : i64, scratch_operands = 0 : i64, tpu.core_type = #tpu.core_type<tc>, window_params = [{transform_indices = @transform_0, window_bounds = array<i64: 8, 256>}, {pipeline_mode = #tpu.pipeline_mode<synchronous>, transform_indices = @transform_1, window_bounds = array<i64: 8, 1>}, {pipeline_mode = #tpu.pipeline_mode<synchronous>, transform_indices = @transform_2, window_bounds = array<i64: 8, 1>}, {transform_indices = @transform_3, window_bounds = array<i64: 8, 256>}]} {
    %c0 = arith.constant 0 : index
    %c0_0 = arith.constant 0 : index
    %0 = vector.load %arg3[%c0, %c0_0] : memref<8x1xf32, #tpu.memory_space<vmem>>, vector<8x1xf32>
    %c0_1 = arith.constant 0 : index
    %c0_2 = arith.constant 0 : index
    %1 = vector.load %arg4[%c0_1, %c0_2] : memref<8x1xf32, #tpu.memory_space<vmem>>, vector<8x1xf32>
    %c0_3 = arith.constant 0 : index
    %c0_4 = arith.constant 0 : index
    %2 = vector.load %arg2[%c0_3, %c0_4] : memref<8x256xf32, #tpu.memory_space<vmem>>, vector<8x256xf32>
    %3 = vector.broadcast %0 : vector<8x1xf32> to vector<8x256xf32>
    %4 = arith.mulf %2, %3 : vector<8x256xf32>
    %5 = vector.broadcast %1 : vector<8x1xf32> to vector<8x256xf32>
    %6 = arith.addf %4, %5 : vector<8x256xf32>
    %c0_5 = arith.constant 0 : index
    %c0_6 = arith.constant 0 : index
    %7 = vector.load %arg5[%c0_5, %c0_6] : memref<8x256xf32, #tpu.memory_space<vmem>>, vector<8x256xf32>
    tpu.vector_store %arg5[%c0_5, %c0_6], %6 {strides = array<i32>} : memref<8x256xf32, #tpu.memory_space<vmem>>, vector<8x256xf32>,
    return
  }
  func.func @transform_0(%arg0: i32, %arg1: i32) -> (i32, i32) {
    %c0_i32 = arith.constant 0 : i32
    return %arg0, %arg1 : i32, i32
  }
  func.func @transform_1(%arg0: i32, %arg1: i32) -> (i32, i32) {
    %c0_i32 = arith.constant 0 : i32
    %c0_i32_0 = arith.constant 0 : i32
    %c0_i32_1 = arith.constant 0 : i32
    return %c0_i32, %c0_i32_0 : i32, i32
  }
  func.func @transform_2(%arg0: i32, %arg1: i32) -> (i32, i32) {
    %c0_i32 = arith.constant 0 : i32
    %c0_i32_0 = arith.constant 0 : i32
    %c0_i32_1 = arith.constant 0 : i32
    return %c0_i32, %c0_i32_0 : i32, i32
  }
  func.func @transform_3(%arg0: i32, %arg1: i32) -> (i32, i32) {
    %c0_i32 = arith.constant 0 : i32
    return %arg0, %arg1 : i32, i32
  }
}

</mosaic_0001>

<llo_original>
// kernel: tpu_custom_call.1
$region0: #{tpu_custom_call.1}
  #allocation0 [shape = 'u32[]', space=smem, size = 0x4, offset = 0x4, fixed_abs, tag = 'smem constant byte address 0x4 - core index']
  #allocation1 [shape = 'u32[144,128]{1,0:T(1,128)}', space=vmem, size = 0x12000, scoped, tag = 'internal scratch']
  %s0 = inlined_call_operand.vmem [shape: f32[8,256], index: 0, kind: input, shape index: {}]
  %s1 = inlined_call_operand.vmem [shape: f32[8,1], index: 1, kind: input, shape index: {}]
  %s2 = inlined_call_operand.vmem [shape: f32[8,1], index: 2, kind: input, shape index: {}]
  %s3 = inlined_call_operand.hbm [shape: f32[8,256], index: 3, kind: output, shape index: {}]
  %s4 = sld [smem:[#allocation0]]
  $region22: #{tpu_custom_call.1} parent=0
    _
  %s6 = ssub.s32 1, %s4
  %s7 = scalar_select 0, %s6, %s4
  $region1: #{tpu_custom_call.1} parent=0
    #allocation2 [shape = 'u8[8192]{0}', space=vmem, size = 0x2000, scoped, tag = 'output window, operand 0, single buffered']
    #allocation3 [shape = 's32[1]{0}', space=sflag, size = 0x4, scoped, tag = 'scoped memory for tpu_custom_call.1']
    %8 = vsyncpa [#allocation3], 0
    // Predicated region
    $region2: #{tpu_custom_call.1} parent=1 // pred_check
      _
    $region3: #{tpu_custom_call.1} parent=1 // pred_check_branch
      %10 = sbr.rel (0) target = $region5
    $region4: #{tpu_custom_call.1} parent=1 // pred_region
      _
    $region5: #{tpu_custom_call.1} parent=1 // pred_fallthru
      _
    // Predicated region
    $region6: #{tpu_custom_call.1} parent=1 // pred_check
      _
    $region7: #{tpu_custom_call.1} parent=1 // pred_check_branch
      %12 = sbr.rel (0) target = $region9
    $region8: #{tpu_custom_call.1} parent=1 // pred_region
      _
    $region9: #{tpu_custom_call.1} parent=1 // pred_fallthru
      _
    // Predicated region
    $region10: #{tpu_custom_call.1} parent=1 // pred_check
      _
    $region11: #{tpu_custom_call.1} parent=1 // pred_check_branch
      %14 = sbr.rel (0) target = $region13
    $region12: #{tpu_custom_call.1} parent=1 // pred_region
      _
    $region13: #{tpu_custom_call.1} parent=1 // pred_fallthru
      _
    %v15 = vld [vmem:[%s1] sm:$0xff]
    %v16 = vld [vmem:[%s2] sm:$0xff]
    %v17 = vld [vmem:[%s0] sm:$0xff]
    %v18 = vld [vmem:[%s0 + $0x8] sm:$0xff]
    %20 = vset.pattern.permute.xlu0 0
    %21 = vperm.xlu0 %20, %v15
    %v22 = vpop.permute.xlu0 %21
    %v24 = vmul.f32 %v17, %v22
    %v25 = vmul.f32 %v18, %v22
    %27 = vset.pattern.permute.xlu0 0
    %28 = vperm.xlu0 %27, %v16
    %v29 = vpop.permute.xlu0 %28
    %v31 = vadd.f32 %v24, %v29
    %v32 = vadd.f32 %v25, %v29
    %33 = vst [vmem:[#allocation2] sm:$0xff] %v31
    %34 = vst [vmem:[#allocation2 + $0x8] sm:$0xff] %v32
    // Predicated region
    $region14: #{tpu_custom_call.1} parent=1 // pred_check
      _
    $region15: #{tpu_custom_call.1} parent=1 // pred_check_branch
      %36 = sbr.rel (0) target = $region17
    $region16: #{tpu_custom_call.1} parent=1 // pred_region
      %s38 = ssub.s32 256, 256
      %39 = vsyncadd [#allocation3], %s38
      %s41 = sshll.u32 [#allocation2], 4
      %s42 = int_to_ptr.vmem [resolvable:$true] %s41
      %44 = dma.vmem_to_hbm [thread:$0]  %s42, 256, %s3, [#allocation3]
    $region17: #{tpu_custom_call.1} parent=1 // pred_fallthru
      _
    // Predicated region
    $region18: #{tpu_custom_call.1} parent=1 // pred_check
      _
    $region19: #{tpu_custom_call.1} parent=1 // pred_check_branch
      %46 = sbr.rel (0) target = $region21
    $region20: #{tpu_custom_call.1} parent=1 // pred_region
      %47 = dma.done [#allocation3], 256
    $region21: #{tpu_custom_call.1} parent=1 // pred_fallthru
      _
    %48 = vsyncpa [#allocation3], 1

</llo_original>
